<compile_context>
chip_gen: v6e
topology: v6e:2x2x1
jax: 0.10.0
libtpu: 0.0.40
codegen_flags: <defaults>
</compile_context>

<pallas_src>
import functools

import jax
import jax.numpy as jnp
from jax.experimental import pallas as pl
from jax.experimental.pallas import tpu as pltpu

_LANE = 128
_SUBLANE = 8


def _round_up(v, m):
    return (v + m - 1) // m * m


def _pad2(a, rows, cols):
    out = jnp.zeros((rows, cols), jnp.float32)
    return out.at[: a.shape[0], : a.shape[1]].set(a.astype(jnp.float32))


# --------------------------------------------------------------------------
# Fused kernel: encoder (2x SAGEConv, mean aggr) + edge decoder (2x Linear)
# --------------------------------------------------------------------------
def _fused_kernel(adj_ref, x_ref, w1_ref, b1_ref, w2_ref, b2_ref,
                  s_src_ref, s_dst_ref, wd1_ref, bd1_ref, wd2_ref, bd2_ref,
                  o_ref):
    adj = adj_ref[...]
    x = x_ref[...]

    # SAGEConv layer 1: h1 = relu([A@x, x] @ [Wl1; Wr1] + b1)
    agg1 = jnp.dot(adj, x, preferred_element_type=jnp.float32)
    h1 = jnp.dot(jnp.concatenate([agg1, x], axis=1), w1_ref[...],
                 preferred_element_type=jnp.float32) + b1_ref[...]
    h1 = jnp.maximum(h1, 0.0)

    # SAGEConv layer 2: z = [A@h1, h1] @ [Wl2; Wr2] + b2
    agg2 = jnp.dot(adj, h1, preferred_element_type=jnp.float32)
    z = jnp.dot(jnp.concatenate([agg2, h1], axis=1), w2_ref[...],
                preferred_element_type=jnp.float32) + b2_ref[...]

    # EdgeDecoder: gather endpoints via one-hot matmuls, fc1 + relu, fc2
    z_src = jnp.dot(s_src_ref[...], z, preferred_element_type=jnp.float32)
    z_dst = jnp.dot(s_dst_ref[...], z, preferred_element_type=jnp.float32)
    e = jnp.dot(jnp.concatenate([z_src, z_dst], axis=1), wd1_ref[...],
                preferred_element_type=jnp.float32) + bd1_ref[...]
    e = jnp.maximum(e, 0.0)
    out = jnp.dot(e, wd2_ref[...], preferred_element_type=jnp.float32) + bd2_ref[...]
    o_ref[...] = out.astype(o_ref.dtype)


# --------------------------------------------------------------------------
# One-time (per-graph / per-model) preparation -- hoisted out of the hot path
# --------------------------------------------------------------------------
def precompute_graph(edge_index, num_nodes):
    """Dense row-normalized adjacency padded to a lane-aligned [Np, Np]."""
    n_pad = _round_up(max(num_nodes, _SUBLANE), _LANE)
    src, dst = edge_index[0], edge_index[1]
    adj = jnp.zeros((n_pad, n_pad), jnp.float32).at[dst, src].add(1.0)
    deg = jnp.sum(adj, axis=1, keepdims=True)
    # zero rows stay zero (isolated nodes aggregate to 0, matching scatter-mean)
    return adj / jnp.maximum(deg, 1.0)


def pack_params(params, in_channels, hidden_channels):
    """Zero-pad to 128 lanes and stack lin_l/lin_r (and fc1 halves) on K."""
    fp = _round_up(in_channels, _LANE)
    hp = _round_up(hidden_channels, _LANE)
    h = hidden_channels
    w_fc1 = params["w_fc1"]  # [2H, H] input-major
    return {
        "w1": jnp.concatenate([_pad2(params["wl1"], fp, hp),
                               _pad2(params["wr1"], fp, hp)], axis=0),
        "b1": _pad2(params["b1"], 1, hp),
        "w2": jnp.concatenate([_pad2(params["wl2"], hp, hp),
                               _pad2(params["wr2"], hp, hp)], axis=0),
        "b2": _pad2(params["b2"], 1, hp),
        "wd1": jnp.concatenate([_pad2(w_fc1[:h], hp, hp),
                                _pad2(w_fc1[h:], hp, hp)], axis=0),
        "bd1": _pad2(params["b_fc1"], 1, hp),
        "wd2": _pad2(params["w_fc2"], hp, _LANE),
        "bd2": _pad2(params["b_fc2"], 1, _LANE),
    }


# --------------------------------------------------------------------------
# Hot-path forward (single fused pallas_call)
# --------------------------------------------------------------------------
@functools.partial(jax.jit, static_argnames=("num_sd_edges",))
def sd_regression_forward(x, adj_norm, sd_index, packed, *, num_sd_edges):
    n_pad = adj_norm.shape[0]
    fp = packed["w1"].shape[0] // 2
    e_pad = _round_up(max(num_sd_edges, _SUBLANE), _SUBLANE)

    x_p = _pad2(x, n_pad, fp)
    rows = jnp.arange(num_sd_edges)
    s_src = jnp.zeros((e_pad, n_pad), jnp.float32).at[rows, sd_index[0]].set(1.0)
    s_dst = jnp.zeros((e_pad, n_pad), jnp.float32).at[rows, sd_index[1]].set(1.0)

    vmem = pl.BlockSpec(memory_space=pltpu.MemorySpace.VMEM)
    out = pl.pallas_call(
        _fused_kernel,
        out_shape=jax.ShapeDtypeStruct((e_pad, _LANE), jnp.float32),
        in_specs=[vmem] * 12,
        out_specs=vmem,
    )(adj_norm, x_p,
      packed["w1"], packed["b1"], packed["w2"], packed["b2"],
      s_src, s_dst,
      packed["wd1"], packed["bd1"], packed["wd2"], packed["bd2"])
    return out[:num_sd_edges, 0]


# --------------------------------------------------------------------------
# Parameter init (PyG SAGEConv defaults: lin_l has bias, lin_r does not;
# torch.nn.Linear uniform(-1/sqrt(fan_in), 1/sqrt(fan_in)))
# --------------------------------------------------------------------------
def init_params(key, in_channels, hidden_channels):
    ks = jax.random.split(key, 8)

    def lin(k, fan_in, shape):
        bound = 1.0 / float(fan_in) ** 0.5
        return jax.random.uniform(k, shape, jnp.float32, -bound, bound)

    return {
        # encoder conv1: SAGEConv(in -> hidden)
        "wl1": lin(ks[0], in_channels, (in_channels, hidden_channels)),
        "wr1": lin(ks[1], in_channels, (in_channels, hidden_channels)),
        "b1": jnp.zeros((1, hidden_channels), jnp.float32),
        # encoder conv2: SAGEConv(hidden -> hidden)
        "wl2": lin(ks[2], hidden_channels, (hidden_channels, hidden_channels)),
        "wr2": lin(ks[3], hidden_channels, (hidden_channels, hidden_channels)),
        "b2": jnp.zeros((1, hidden_channels), jnp.float32),
        # decoder fc1: Linear(2*hidden -> hidden), input-major
        "w_fc1": lin(ks[4], 2 * hidden_channels, (2 * hidden_channels, hidden_channels)),
        "b_fc1": lin(ks[5], 2 * hidden_channels, (1, hidden_channels)),
        # decoder fc2: Linear(hidden -> 1), input-major
        "w_fc2": lin(ks[6], hidden_channels, (hidden_channels, 1)),
        "b_fc2": lin(ks[7], hidden_channels, (1, 1)),
    }


# --------------------------------------------------------------------------
# Pure-JAX reference (scatter-mean aggregation + gather-based decoder)
# --------------------------------------------------------------------------
def _reference_forward(x, edge_index, sd_index, params):
    n = x.shape[0]
    src, dst = edge_index[0], edge_index[1]

    def aggr_mean(feat):
        summed = jnp.zeros((n, feat.shape[1]), jnp.float32).at[dst].add(feat[src])
        count = jnp.zeros((n, 1), jnp.float32).at[dst].add(1.0)
        return summed / jnp.maximum(count, 1.0)

    h1 = aggr_mean(x) @ params["wl1"] + params["b1"] + x @ params["wr1"]
    h1 = jnp.maximum(h1, 0.0)
    z = aggr_mean(h1) @ params["wl2"] + params["b2"] + h1 @ params["wr2"]

    edge_emb = jnp.concatenate([z[sd_index[0]], z[sd_index[1]]], axis=1)
    edge_emb = jnp.maximum(edge_emb @ params["w_fc1"] + params["b_fc1"], 0.0)
    out = edge_emb @ params["w_fc2"] + params["b_fc2"]
    return out.reshape(-1)


if __name__ == "__main__":
    key = jax.random.PRNGKey(0)
    k_x, k_e, k_s, k_p = jax.random.split(key, 4)

    num_nodes = 16
    in_channels = 32
    hidden_channels = 32
    num_edges = 48
    num_sd_edges = 24

    x = jax.random.normal(k_x, (num_nodes, in_channels), jnp.float32)
    edge_index = jax.random.randint(k_e, (2, num_edges), 0, num_nodes, jnp.int32)
    sd_index = jax.random.randint(k_s, (2, num_sd_edges), 0, num_nodes, jnp.int32)
    params = init_params(k_p, in_channels, hidden_channels)

    # Graph-structure / weight prep done ONCE (outside the hot forward path).
    adj_norm = precompute_graph(edge_index, num_nodes)
    packed = pack_params(params, in_channels, hidden_channels)

    out = sd_regression_forward(x, adj_norm, sd_index, packed,
                                num_sd_edges=num_sd_edges)
    out = jax.block_until_ready(out)

    ref = _reference_forward(x, edge_index, sd_index, params)
    assert out.shape == (num_sd_edges,)
    assert jnp.allclose(out, ref, atol=1e-3, rtol=1e-3), "mismatch vs reference"

    print("KERNEL_OK")
</pallas_src>

<mosaic_0001>
module attributes {stable_mosaic.version = 11 : i64} {
  func.func @_fused_kernel(%arg0: memref<128x128xf32, #tpu.memory_space<vmem>>, %arg1: memref<128x128xf32, #tpu.memory_space<vmem>>, %arg2: memref<256x128xf32, #tpu.memory_space<vmem>>, %arg3: memref<1x128xf32, #tpu.memory_space<vmem>>, %arg4: memref<256x128xf32, #tpu.memory_space<vmem>>, %arg5: memref<1x128xf32, #tpu.memory_space<vmem>>, %arg6: memref<24x128xf32, #tpu.memory_space<vmem>>, %arg7: memref<24x128xf32, #tpu.memory_space<vmem>>, %arg8: memref<256x128xf32, #tpu.memory_space<vmem>>, %arg9: memref<1x128xf32, #tpu.memory_space<vmem>>, %arg10: memref<128x128xf32, #tpu.memory_space<vmem>>, %arg11: memref<1x128xf32, #tpu.memory_space<vmem>>, %arg12: memref<24x128xf32, #tpu.memory_space<vmem>>) attributes {dimension_semantics = [], scalar_prefetch = 0 : i64, scratch_operands = 0 : i64, tpu.core_type = #tpu.core_type<tc>} {
    %c0 = arith.constant 0 : index
    %c0_0 = arith.constant 0 : index
    %0 = vector.load %arg0[%c0, %c0_0] : memref<128x128xf32, #tpu.memory_space<vmem>>, vector<128x128xf32>
    %c0_1 = arith.constant 0 : index
    %c0_2 = arith.constant 0 : index
    %1 = vector.load %arg1[%c0_1, %c0_2] : memref<128x128xf32, #tpu.memory_space<vmem>>, vector<128x128xf32>
    %cst = arith.constant dense<0.000000e+00> : vector<128x128xf32>
    %2 = tpu.matmul %0, %1, %cst {dimension_numbers = #tpu.dot_dimension_numbers<[1], [0], [0], [1], [0, 0, 1, 1], [], []>} : vector<128x128xf32>, vector<128x128xf32>, vector<128x128xf32> -> vector<128x128xf32>
    %3 = tpu.concatenate %2, %1 in 1 : vector<128x128xf32>, vector<128x128xf32> -> vector<128x256xf32>
    %c0_3 = arith.constant 0 : index
    %c0_4 = arith.constant 0 : index
    %4 = vector.load %arg2[%c0_3, %c0_4] : memref<256x128xf32, #tpu.memory_space<vmem>>, vector<256x128xf32>
    %cst_5 = arith.constant dense<0.000000e+00> : vector<128x128xf32>
    %5 = tpu.matmul %3, %4, %cst_5 {dimension_numbers = #tpu.dot_dimension_numbers<[1], [0], [0], [1], [0, 0, 1, 1], [], []>} : vector<128x256xf32>, vector<256x128xf32>, vector<128x128xf32> -> vector<128x128xf32>
    %c0_6 = arith.constant 0 : index
    %c0_7 = arith.constant 0 : index
    %6 = vector.load %arg3[%c0_6, %c0_7] : memref<1x128xf32, #tpu.memory_space<vmem>>, vector<1x128xf32>
    %7 = vector.broadcast %6 : vector<1x128xf32> to vector<128x128xf32>
    %8 = arith.addf %5, %7 : vector<128x128xf32>
    %cst_8 = arith.constant 0.000000e+00 : f32
    %9 = vector.broadcast %cst_8 : f32 to vector<128x128xf32>
    %10 = arith.maximumf %8, %9 : vector<128x128xf32>
    %cst_9 = arith.constant dense<0.000000e+00> : vector<128x128xf32>
    %11 = tpu.matmul %0, %10, %cst_9 {dimension_numbers = #tpu.dot_dimension_numbers<[1], [0], [0], [1], [0, 0, 1, 1], [], []>} : vector<128x128xf32>, vector<128x128xf32>, vector<128x128xf32> -> vector<128x128xf32>
    %12 = tpu.concatenate %11, %10 in 1 : vector<128x128xf32>, vector<128x128xf32> -> vector<128x256xf32>
    %c0_10 = arith.constant 0 : index
    %c0_11 = arith.constant 0 : index
    %13 = vector.load %arg4[%c0_10, %c0_11] : memref<256x128xf32, #tpu.memory_space<vmem>>, vector<256x128xf32>
    %cst_12 = arith.constant dense<0.000000e+00> : vector<128x128xf32>
    %14 = tpu.matmul %12, %13, %cst_12 {dimension_numbers = #tpu.dot_dimension_numbers<[1], [0], [0], [1], [0, 0, 1, 1], [], []>} : vector<128x256xf32>, vector<256x128xf32>, vector<128x128xf32> -> vector<128x128xf32>
    %c0_13 = arith.constant 0 : index
    %c0_14 = arith.constant 0 : index
    %15 = vector.load %arg5[%c0_13, %c0_14] : memref<1x128xf32, #tpu.memory_space<vmem>>, vector<1x128xf32>
    %16 = vector.broadcast %15 : vector<1x128xf32> to vector<128x128xf32>
    %17 = arith.addf %14, %16 : vector<128x128xf32>
    %c0_15 = arith.constant 0 : index
    %c0_16 = arith.constant 0 : index
    %18 = vector.load %arg6[%c0_15, %c0_16] : memref<24x128xf32, #tpu.memory_space<vmem>>, vector<24x128xf32>
    %cst_17 = arith.constant dense<0.000000e+00> : vector<24x128xf32>
    %19 = tpu.matmul %18, %17, %cst_17 {dimension_numbers = #tpu.dot_dimension_numbers<[1], [0], [0], [1], [0, 0, 1, 1], [], []>} : vector<24x128xf32>, vector<128x128xf32>, vector<24x128xf32> -> vector<24x128xf32>
    %c0_18 = arith.constant 0 : index
    %c0_19 = arith.constant 0 : index
    %20 = vector.load %arg7[%c0_18, %c0_19] : memref<24x128xf32, #tpu.memory_space<vmem>>, vector<24x128xf32>
    %cst_20 = arith.constant dense<0.000000e+00> : vector<24x128xf32>
    %21 = tpu.matmul %20, %17, %cst_20 {dimension_numbers = #tpu.dot_dimension_numbers<[1], [0], [0], [1], [0, 0, 1, 1], [], []>} : vector<24x128xf32>, vector<128x128xf32>, vector<24x128xf32> -> vector<24x128xf32>
    %22 = tpu.concatenate %19, %21 in 1 : vector<24x128xf32>, vector<24x128xf32> -> vector<24x256xf32>
    %c0_21 = arith.constant 0 : index
    %c0_22 = arith.constant 0 : index
    %23 = vector.load %arg8[%c0_21, %c0_22] : memref<256x128xf32, #tpu.memory_space<vmem>>, vector<256x128xf32>
    %cst_23 = arith.constant dense<0.000000e+00> : vector<24x128xf32>
    %24 = tpu.matmul %22, %23, %cst_23 {dimension_numbers = #tpu.dot_dimension_numbers<[1], [0], [0], [1], [0, 0, 1, 1], [], []>} : vector<24x256xf32>, vector<256x128xf32>, vector<24x128xf32> -> vector<24x128xf32>
    %c0_24 = arith.constant 0 : index
    %c0_25 = arith.constant 0 : index
    %25 = vector.load %arg9[%c0_24, %c0_25] : memref<1x128xf32, #tpu.memory_space<vmem>>, vector<1x128xf32>
    %26 = vector.broadcast %25 : vector<1x128xf32> to vector<24x128xf32>
    %27 = arith.addf %24, %26 : vector<24x128xf32>
    %cst_26 = arith.constant 0.000000e+00 : f32
    %28 = vector.broadcast %cst_26 : f32 to vector<24x128xf32>
    %29 = arith.maximumf %27, %28 : vector<24x128xf32>
    %c0_27 = arith.constant 0 : index
    %c0_28 = arith.constant 0 : index
    %30 = vector.load %arg10[%c0_27, %c0_28] : memref<128x128xf32, #tpu.memory_space<vmem>>, vector<128x128xf32>
    %cst_29 = arith.constant dense<0.000000e+00> : vector<24x128xf32>
    %31 = tpu.matmul %29, %30, %cst_29 {dimension_numbers = #tpu.dot_dimension_numbers<[1], [0], [0], [1], [0, 0, 1, 1], [], []>} : vector<24x128xf32>, vector<128x128xf32>, vector<24x128xf32> -> vector<24x128xf32>
    %c0_30 = arith.constant 0 : index
    %c0_31 = arith.constant 0 : index
    %32 = vector.load %arg11[%c0_30, %c0_31] : memref<1x128xf32, #tpu.memory_space<vmem>>, vector<1x128xf32>
    %33 = vector.broadcast %32 : vector<1x128xf32> to vector<24x128xf32>
    %34 = arith.addf %31, %33 : vector<24x128xf32>
    %c0_32 = arith.constant 0 : index
    %c0_33 = arith.constant 0 : index
    %35 = vector.load %arg12[%c0_32, %c0_33] : memref<24x128xf32, #tpu.memory_space<vmem>>, vector<24x128xf32>
    tpu.vector_store %arg12[%c0_32, %c0_33], %34 {strides = array<i32>} : memref<24x128xf32, #tpu.memory_space<vmem>>, vector<24x128xf32>,
    return
  }
}

</mosaic_0001>

<llo_original>
// kernel: sd_regression_forward.1
$region0: #{sd_regression_forward.1}
  #allocation0 [shape = 'u32[]', space=smem, size = 0x4, offset = 0x4, fixed_abs, tag = 'smem constant byte address 0x4 - core index']
  #allocation1 [shape = 'u32[144,128]{1,0:T(1,128)}', space=vmem, size = 0x12000, scoped, tag = 'internal scratch']
  %s0 = inlined_call_operand.vmem [shape: f32[128,128], index: 0, kind: input, shape index: {}]
  %s1 = inlined_call_operand.vmem [shape: f32[128,128], index: 1, kind: input, shape index: {}]
  %s2 = inlined_call_operand.vmem [shape: f32[256,128], index: 2, kind: input, shape index: {}]
  %s3 = inlined_call_operand.vmem [shape: f32[1,128], index: 3, kind: input, shape index: {}]
  %s4 = inlined_call_operand.vmem [shape: f32[256,128], index: 4, kind: input, shape index: {}]
  %s5 = inlined_call_operand.vmem [shape: f32[1,128], index: 5, kind: input, shape index: {}]
  %s6 = inlined_call_operand.vmem [shape: f32[24,128], index: 6, kind: input, shape index: {}]
  %s7 = inlined_call_operand.vmem [shape: f32[24,128], index: 7, kind: input, shape index: {}]
  %s8 = inlined_call_operand.vmem [shape: f32[256,128], index: 8, kind: input, shape index: {}]
  %s9 = inlined_call_operand.vmem [shape: f32[1,128], index: 9, kind: input, shape index: {}]
  %s10 = inlined_call_operand.vmem [shape: f32[128,128], index: 10, kind: input, shape index: {}]
  %s11 = inlined_call_operand.vmem [shape: f32[1,128], index: 11, kind: input, shape index: {}]
  %s12 = inlined_call_operand.vmem [shape: f32[24,128], index: 12, kind: output, shape index: {}]
  %s13 = sld [smem:[#allocation0]]
  $region58: #{sd_regression_forward.1} parent=0
    _
  %s15 = ssub.s32 1, %s13
  %s16 = scalar_select 0, %s15, %s13
  // Predicated region
  $region2: #{sd_regression_forward.1} parent=0 // pred_check
    _
  $region3: #{sd_regression_forward.1} parent=0 // pred_check_branch
    %18 = sbr.rel (0) target = $region5
  $region4: #{sd_regression_forward.1} parent=0 // pred_region
    _
  $region5: #{sd_regression_forward.1} parent=0 // pred_fallthru
    _
  // Predicated region
  $region6: #{sd_regression_forward.1} parent=0 // pred_check
    _
  $region7: #{sd_regression_forward.1} parent=0 // pred_check_branch
    %20 = sbr.rel (0) target = $region9
  $region8: #{sd_regression_forward.1} parent=0 // pred_region
    _
  $region9: #{sd_regression_forward.1} parent=0 // pred_fallthru
    _
  // Predicated region
  $region10: #{sd_regression_forward.1} parent=0 // pred_check
    _
  $region11: #{sd_regression_forward.1} parent=0 // pred_check_branch
    %22 = sbr.rel (0) target = $region13
  $region12: #{sd_regression_forward.1} parent=0 // pred_region
    _
  $region13: #{sd_regression_forward.1} parent=0 // pred_fallthru
    _
  // Predicated region
  $region14: #{sd_regression_forward.1} parent=0 // pred_check
    _
  $region15: #{sd_regression_forward.1} parent=0 // pred_check_branch
    %24 = sbr.rel (0) target = $region17
  $region16: #{sd_regression_forward.1} parent=0 // pred_region
    _
  $region17: #{sd_regression_forward.1} parent=0 // pred_fallthru
    _
  // Predicated region
  $region18: #{sd_regression_forward.1} parent=0 // pred_check
    _
  $region19: #{sd_regression_forward.1} parent=0 // pred_check_branch
    %26 = sbr.rel (0) target = $region21
  $region20: #{sd_regression_forward.1} parent=0 // pred_region
    _
  $region21: #{sd_regression_forward.1} parent=0 // pred_fallthru
    _
  // Predicated region
  $region22: #{sd_regression_forward.1} parent=0 // pred_check
    _
  $region23: #{sd_regression_forward.1} parent=0 // pred_check_branch
    %28 = sbr.rel (0) target = $region25
  $region24: #{sd_regression_forward.1} parent=0 // pred_region
    _
  $region25: #{sd_regression_forward.1} parent=0 // pred_fallthru
    _
  // Predicated region
  $region26: #{sd_regression_forward.1} parent=0 // pred_check
    _
  $region27: #{sd_regression_forward.1} parent=0 // pred_check_branch
    %30 = sbr.rel (0) target = $region29
  $region28: #{sd_regression_forward.1} parent=0 // pred_region
    _
  $region29: #{sd_regression_forward.1} parent=0 // pred_fallthru
    _
  // Predicated region
  $region30: #{sd_regression_forward.1} parent=0 // pred_check
    _
  $region31: #{sd_regression_forward.1} parent=0 // pred_check_branch
    %32 = sbr.rel (0) target = $region33
  $region32: #{sd_regression_forward.1} parent=0 // pred_region
    _
  $region33: #{sd_regression_forward.1} parent=0 // pred_fallthru
    _
  // Predicated region
  $region34: #{sd_regression_forward.1} parent=0 // pred_check
    _
  $region35: #{sd_regression_forward.1} parent=0 // pred_check_branch
    %34 = sbr.rel (0) target = $region37
  $region36: #{sd_regression_forward.1} parent=0 // pred_region
    _
  $region37: #{sd_regression_forward.1} parent=0 // pred_fallthru
    _
  // Predicated region
  $region38: #{sd_regression_forward.1} parent=0 // pred_check
    _
  $region39: #{sd_regression_forward.1} parent=0 // pred_check_branch
    %36 = sbr.rel (0) target = $region41
  $region40: #{sd_regression_forward.1} parent=0 // pred_region
    _
  $region41: #{sd_regression_forward.1} parent=0 // pred_fallthru
    _
  // Predicated region
  $region42: #{sd_regression_forward.1} parent=0 // pred_check
    _
  $region43: #{sd_regression_forward.1} parent=0 // pred_check_branch
    %38 = sbr.rel (0) target = $region45
  $region44: #{sd_regression_forward.1} parent=0 // pred_region
    _
  $region45: #{sd_regression_forward.1} parent=0 // pred_fallthru
    _
  // Predicated region
  $region46: #{sd_regression_forward.1} parent=0 // pred_check
    _
  $region47: #{sd_regression_forward.1} parent=0 // pred_check_branch
    %40 = sbr.rel (0) target = $region49
  $region48: #{sd_regression_forward.1} parent=0 // pred_region
    _
  $region49: #{sd_regression_forward.1} parent=0 // pred_fallthru
    _
  %v41 = vld [vmem:[%s0] sm:$0xff]
  %v42 = vld [vmem:[%s0 + $0x8] sm:$0xff]
  %v43 = vld [vmem:[%s0 + $0x10] sm:$0xff]
  %v44 = vld [vmem:[%s0 + $0x18] sm:$0xff]
  %v45 = vld [vmem:[%s0 + $0x20] sm:$0xff]
  %v46 = vld [vmem:[%s0 + $0x28] sm:$0xff]
  %v47 = vld [vmem:[%s0 + $0x30] sm:$0xff]
  %v48 = vld [vmem:[%s0 + $0x38] sm:$0xff]
  %v49 = vld [vmem:[%s0 + $0x40] sm:$0xff]
  %v50 = vld [vmem:[%s0 + $0x48] sm:$0xff]
  %v51 = vld [vmem:[%s0 + $0x50] sm:$0xff]
  %v52 = vld [vmem:[%s0 + $0x58] sm:$0xff]
  %v53 = vld [vmem:[%s0 + $0x60] sm:$0xff]
  %v54 = vld [vmem:[%s0 + $0x68] sm:$0xff]
  %v55 = vld [vmem:[%s0 + $0x70] sm:$0xff]
  %v56 = vld [vmem:[%s0 + $0x78] sm:$0xff]
  %v57 = vld [vmem:[%s1] sm:$0xff]
  %v58 = vld [vmem:[%s1 + $0x8] sm:$0xff]
  %v59 = vld [vmem:[%s1 + $0x10] sm:$0xff]
  %v60 = vld [vmem:[%s1 + $0x18] sm:$0xff]
  %v61 = vld [vmem:[%s1 + $0x20] sm:$0xff]
  %v62 = vld [vmem:[%s1 + $0x28] sm:$0xff]
  %v63 = vld [vmem:[%s1 + $0x30] sm:$0xff]
  %v64 = vld [vmem:[%s1 + $0x38] sm:$0xff]
  %v65 = vld [vmem:[%s1 + $0x40] sm:$0xff]
  %v66 = vld [vmem:[%s1 + $0x48] sm:$0xff]
  %v67 = vld [vmem:[%s1 + $0x50] sm:$0xff]
  %v68 = vld [vmem:[%s1 + $0x58] sm:$0xff]
  %v69 = vld [vmem:[%s1 + $0x60] sm:$0xff]
  %v70 = vld [vmem:[%s1 + $0x68] sm:$0xff]
  %v71 = vld [vmem:[%s1 + $0x70] sm:$0xff]
  %v72 = vld [vmem:[%s1 + $0x78] sm:$0xff]
  %73 = vmatprep.subr.mxu0 0.0
  %74 = vmatpush1.msra.mxu0 %v72
  %75 = vmatprep.subr.mxu0 0.0
  %76 = vmatpush1.msra.mxu0 %v71
  %77 = vmatprep.subr.mxu0 0.0
  %78 = vmatpush1.msra.mxu0 %v70
  %79 = vmatprep.subr.mxu0 0.0
  %80 = vmatpush1.msra.mxu0 %v69
  %81 = vmatprep.subr.mxu0 0.0
  %82 = vmatpush1.msra.mxu0 %v68
  %83 = vmatprep.subr.mxu0 0.0
  %84 = vmatpush1.msra.mxu0 %v67
  %85 = vmatprep.subr.mxu0 0.0
  %86 = vmatpush1.msra.mxu0 %v66
  %87 = vmatprep.subr.mxu0 0.0
  %88 = vmatpush1.msra.mxu0 %v65
  %89 = vmatprep.subr.mxu0 0.0
  %90 = vmatpush1.msra.mxu0 %v64
  %91 = vmatprep.subr.mxu0 0.0
  %92 = vmatpush1.msra.mxu0 %v63
  %93 = vmatprep.subr.mxu0 0.0
  %94 = vmatpush1.msra.mxu0 %v62
  %95 = vmatprep.subr.mxu0 0.0
  %96 = vmatpush1.msra.mxu0 %v61
  %97 = vmatprep.subr.mxu0 0.0
  %98 = vmatpush1.msra.mxu0 %v60
  %99 = vmatprep.subr.mxu0 0.0
  %100 = vmatpush1.msra.mxu0 %v59
  %101 = vmatprep.subr.mxu0 0.0
  %102 = vmatpush1.msra.mxu0 %v58
  %103 = vmatprep.subr.mxu0 0.0
  %104 = vmatpush1.msra.mxu0 %v57
  %105 = vmatprep.subr.mxu0 0.0
  %106 = vmatpush2.msra.mxu0 0.0
  %107 = vmatprep.subr.mxu0 0.0
  %108 = vmatpush2.msra.mxu0 0.0
  %109 = vmatprep.subr.mxu0 0.0
  %110 = vmatpush2.msra.mxu0 0.0
  %111 = vmatprep.subr.mxu0 0.0
  %112 = vmatpush2.msra.mxu0 0.0
  %113 = vmatprep.subr.mxu0 0.0
  %114 = vmatpush2.msra.mxu0 0.0
  %115 = vmatprep.subr.mxu0 0.0
  %116 = vmatpush2.msra.mxu0 0.0
  %117 = vmatprep.subr.mxu0 0.0
  %118 = vmatpush2.msra.mxu0 0.0
  %119 = vmatprep.subr.mxu0 0.0
  %120 = vmatpush2.msra.mxu0 0.0
  %121 = vmatprep.subr.mxu0 0.0
  %122 = vmatpush2.msra.mxu0 0.0
  %123 = vmatprep.subr.mxu0 0.0
  %124 = vmatpush2.msra.mxu0 0.0
  %125 = vmatprep.subr.mxu0 0.0
  %126 = vmatpush2.msra.mxu0 0.0
  %127 = vmatprep.subr.mxu0 0.0
  %128 = vmatpush2.msra.mxu0 0.0
  %129 = vmatprep.subr.mxu0 0.0
  %130 = vmatpush2.msra.mxu0 0.0
  %131 = vmatprep.subr.mxu0 0.0
  %132 = vmatpush2.msra.mxu0 0.0
  %133 = vmatprep.subr.mxu0 0.0
  %134 = vmatpush2.msra.mxu0 0.0
  %135 = vmatprep.subr.mxu0 0.0
  %136 = vmatpush2.msra.mxu0 0.0
  %137 = vmatprep.mubr.f32.mxu0 0.0
  %138 = vmatmul.mubr.f32.gmra.mxu0 %v41
  %v139 = vpop.f32.mrf.mxu0
  %v140 = vadd.f32 0.0, %v139
  %v141 = vpop.f32.mrf.mxu0
  %142 = vmatprep.mubr.f32.mxu0 0.0
  %143 = vmatmul.mubr.f32.gmra.mxu0 %v42
  %v144 = vpop.f32.mrf.mxu0
  %v145 = vadd.f32 0.0, %v144
  %v146 = vpop.f32.mrf.mxu0
  %147 = vmatprep.mubr.f32.mxu0 0.0
  %148 = vmatmul.mubr.f32.gmra.mxu0 %v43
  %v149 = vpop.f32.mrf.mxu0
  %v150 = vadd.f32 0.0, %v149
  %v151 = vpop.f32.mrf.mxu0
  %152 = vmatprep.mubr.f32.mxu0 0.0
  %153 = vmatmul.mubr.f32.gmra.mxu0 %v44
  %v154 = vpop.f32.mrf.mxu0
  %v155 = vadd.f32 0.0, %v154
  %v156 = vpop.f32.mrf.mxu0
  %157 = vmatprep.mubr.f32.mxu0 0.0
  %158 = vmatmul.mubr.f32.gmra.mxu0 %v45
  %v159 = vpop.f32.mrf.mxu0
  %v160 = vadd.f32 0.0, %v159
  %v161 = vpop.f32.mrf.mxu0
  %162 = vmatprep.mubr.f32.mxu0 0.0
  %163 = vmatmul.mubr.f32.gmra.mxu0 %v46
  %v164 = vpop.f32.mrf.mxu0
  %v165 = vadd.f32 0.0, %v164
  %v166 = vpop.f32.mrf.mxu0
  %167 = vmatprep.mubr.f32.mxu0 0.0
  %168 = vmatmul.mubr.f32.gmra.mxu0 %v47
  %v169 = vpop.f32.mrf.mxu0
  %v170 = vadd.f32 0.0, %v169
  %v171 = vpop.f32.mrf.mxu0
  %172 = vmatprep.mubr.f32.mxu0 0.0
  %173 = vmatmul.mubr.f32.gmra.mxu0 %v48
  %v174 = vpop.f32.mrf.mxu0
  %v175 = vadd.f32 0.0, %v174
  %v176 = vpop.f32.mrf.mxu0
  %177 = vmatprep.mubr.f32.mxu0 0.0
  %178 = vmatmul.mubr.f32.gmra.mxu0 %v49
  %v179 = vpop.f32.mrf.mxu0
  %v180 = vadd.f32 0.0, %v179
  %v181 = vpop.f32.mrf.mxu0
  %182 = vmatprep.mubr.f32.mxu0 0.0
  %183 = vmatmul.mubr.f32.gmra.mxu0 %v50
  %v184 = vpop.f32.mrf.mxu0
  %v185 = vadd.f32 0.0, %v184
  %v186 = vpop.f32.mrf.mxu0
  %187 = vmatprep.mubr.f32.mxu0 0.0
  %188 = vmatmul.mubr.f32.gmra.mxu0 %v51
  %v189 = vpop.f32.mrf.mxu0
  %v190 = vadd.f32 0.0, %v189
  %v191 = vpop.f32.mrf.mxu0
  %192 = vmatprep.mubr.f32.mxu0 0.0
  %193 = vmatmul.mubr.f32.gmra.mxu0 %v52
  %v194 = vpop.f32.mrf.mxu0
  %v195 = vadd.f32 0.0, %v194
  %v196 = vpop.f32.mrf.mxu0
  %197 = vmatprep.mubr.f32.mxu0 0.0
  %198 = vmatmul.mubr.f32.gmra.mxu0 %v53
  %v199 = vpop.f32.mrf.mxu0
  %v200 = vadd.f32 0.0, %v199
  %v201 = vpop.f32.mrf.mxu0
  %202 = vmatprep.mubr.f32.mxu0 0.0
  %203 = vmatmul.mubr.f32.gmra.mxu0 %v54
  %v204 = vpop.f32.mrf.mxu0
  %v205 = vadd.f32 0.0, %v204
  %v206 = vpop.f32.mrf.mxu0
  %207 = vmatprep.mubr.f32.mxu0 0.0
  %208 = vmatmul.mubr.f32.gmra.mxu0 %v55
  %v209 = vpop.f32.mrf.mxu0
  %v210 = vadd.f32 0.0, %v209
  %v211 = vpop.f32.mrf.mxu0
  %212 = vmatprep.mubr.f32.mxu0 0.0
  %213 = vmatmul.mubr.f32.gmra.mxu0 %v56
  %v214 = vpop.f32.mrf.mxu0
  %v215 = vadd.f32 0.0, %v214
  %v216 = vpop.f32.mrf.mxu0
  %217 = vdwg.mxu0
  %v218 = vld [vmem:[%s2] sm:$0xff]
  %v219 = vld [vmem:[%s2 + $0x8] sm:$0xff]
  %v220 = vld [vmem:[%s2 + $0x10] sm:$0xff]
  %v221 = vld [vmem:[%s2 + $0x18] sm:$0xff]
  %v222 = vld [vmem:[%s2 + $0x20] sm:$0xff]
  %v223 = vld [vmem:[%s2 + $0x28] sm:$0xff]
  %v224 = vld [vmem:[%s2 + $0x30] sm:$0xff]
  %v225 = vld [vmem:[%s2 + $0x38] sm:$0xff]
  %v226 = vld [vmem:[%s2 + $0x40] sm:$0xff]
  %v227 = vld [vmem:[%s2 + $0x48] sm:$0xff]
  %v228 = vld [vmem:[%s2 + $0x50] sm:$0xff]
  %v229 = vld [vmem:[%s2 + $0x58] sm:$0xff]
  %v230 = vld [vmem:[%s2 + $0x60] sm:$0xff]
  %v231 = vld [vmem:[%s2 + $0x68] sm:$0xff]
  %v232 = vld [vmem:[%s2 + $0x70] sm:$0xff]
  %v233 = vld [vmem:[%s2 + $0x78] sm:$0xff]
  %v234 = vld [vmem:[%s2 + $0x80] sm:$0xff]
  %v235 = vld [vmem:[%s2 + $0x88] sm:$0xff]
  %v236 = vld [vmem:[%s2 + $0x90] sm:$0xff]
  %v237 = vld [vmem:[%s2 + $0x98] sm:$0xff]
  %v238 = vld [vmem:[%s2 + $0xa0] sm:$0xff]
  %v239 = vld [vmem:[%s2 + $0xa8] sm:$0xff]
  %v240 = vld [vmem:[%s2 + $0xb0] sm:$0xff]
  %v241 = vld [vmem:[%s2 + $0xb8] sm:$0xff]
  %v242 = vld [vmem:[%s2 + $0xc0] sm:$0xff]
  %v243 = vld [vmem:[%s2 + $0xc8] sm:$0xff]
  %v244 = vld [vmem:[%s2 + $0xd0] sm:$0xff]
  %v245 = vld [vmem:[%s2 + $0xd8] sm:$0xff]
  %v246 = vld [vmem:[%s2 + $0xe0] sm:$0xff]
  %v247 = vld [vmem:[%s2 + $0xe8] sm:$0xff]
  %v248 = vld [vmem:[%s2 + $0xf0] sm:$0xff]
  %v249 = vld [vmem:[%s2 + $0xf8] sm:$0xff]
  %v250 = vld [vmem:[%s3] sm:$0x1]
  %v252 = vlaneseq
  %v253 = vshrl.u32 %v252, 7
  %v254 = vsub.s32 0, %v253
  %v255 = vrot.slane %v250, %v254
  %257 = vmatprep.subr.mxu0 0.0
  %258 = vmatpush1.msra.mxu0 %v233
  %259 = vmatprep.subr.mxu0 0.0
  %260 = vmatpush1.msra.mxu0 %v232
  %261 = vmatprep.subr.mxu0 0.0
  %262 = vmatpush1.msra.mxu0 %v231
  %263 = vmatprep.subr.mxu0 0.0
  %264 = vmatpush1.msra.mxu0 %v230
  %265 = vmatprep.subr.mxu0 0.0
  %266 = vmatpush1.msra.mxu0 %v229
  %267 = vmatprep.subr.mxu0 0.0
  %268 = vmatpush1.msra.mxu0 %v228
  %269 = vmatprep.subr.mxu0 0.0
  %270 = vmatpush1.msra.mxu0 %v227
  %271 = vmatprep.subr.mxu0 0.0
  %272 = vmatpush1.msra.mxu0 %v226
  %273 = vmatprep.subr.mxu0 0.0
  %274 = vmatpush1.msra.mxu0 %v225
  %275 = vmatprep.subr.mxu0 0.0
  %276 = vmatpush1.msra.mxu0 %v224
  %277 = vmatprep.subr.mxu0 0.0
  %278 = vmatpush1.msra.mxu0 %v223
  %279 = vmatprep.subr.mxu0 0.0
  %280 = vmatpush1.msra.mxu0 %v222
  %281 = vmatprep.subr.mxu0 0.0
  %282 = vmatpush1.msra.mxu0 %v221
  %283 = vmatprep.subr.mxu0 0.0
  %284 = vmatpush1.msra.mxu0 %v220
  %285 = vmatprep.subr.mxu0 0.0
  %286 = vmatpush1.msra.mxu0 %v219
  %287 = vmatprep.subr.mxu0 0.0
  %288 = vmatpush1.msra.mxu0 %v218
  %289 = vmatprep.subr.mxu0 0.0
  %290 = vmatpush2.msra.mxu0 %v249
  %291 = vmatprep.subr.mxu0 0.0
  %292 = vmatpush2.msra.mxu0 %v248
  %293 = vmatprep.subr.mxu0 0.0
  %294 = vmatpush2.msra.mxu0 %v247
  %295 = vmatprep.subr.mxu0 0.0
  %296 = vmatpush2.msra.mxu0 %v246
  %297 = vmatprep.subr.mxu0 0.0
  %298 = vmatpush2.msra.mxu0 %v245
  %299 = vmatprep.subr.mxu0 0.0
  %300 = vmatpush2.msra.mxu0 %v244
  %301 = vmatprep.subr.mxu0 0.0
  %302 = vmatpush2.msra.mxu0 %v243
  %303 = vmatprep.subr.mxu0 0.0
  %304 = vmatpush2.msra.mxu0 %v242
  %305 = vmatprep.subr.mxu0 0.0
  %306 = vmatpush2.msra.mxu0 %v241
  %307 = vmatprep.subr.mxu0 0.0
  %308 = vmatpush2.msra.mxu0 %v240
  %309 = vmatprep.subr.mxu0 0.0
  %310 = vmatpush2.msra.mxu0 %v239
  %311 = vmatprep.subr.mxu0 0.0
  %312 = vmatpush2.msra.mxu0 %v238
  %313 = vmatprep.subr.mxu0 0.0
  %314 = vmatpush2.msra.mxu0 %v237
  %315 = vmatprep.subr.mxu0 0.0
  %316 = vmatpush2.msra.mxu0 %v236
  %317 = vmatprep.subr.mxu0 0.0
  %318 = vmatpush2.msra.mxu0 %v235
  %319 = vmatprep.subr.mxu0 0.0
  %320 = vmatpush2.msra.mxu0 %v234
  %321 = vmatprep.mubr.f32.mxu0 %v57
  %322 = vmatmul.mubr.f32.gmra.mxu0 %v140
  %v323 = vpop.f32.mrf.mxu0
  %v324 = vadd.f32 %v255, %v323
  %v325 = vpop.f32.mrf.mxu0
  %326 = vmatprep.mubr.f32.mxu0 %v58
  %327 = vmatmul.mubr.f32.gmra.mxu0 %v145
  %v328 = vpop.f32.mrf.mxu0
  %v329 = vadd.f32 %v255, %v328
  %v330 = vpop.f32.mrf.mxu0
  %331 = vmatprep.mubr.f32.mxu0 %v59
  %332 = vmatmul.mubr.f32.gmra.mxu0 %v150
  %v333 = vpop.f32.mrf.mxu0
  %v334 = vadd.f32 %v255, %v333
  %v335 = vpop.f32.mrf.mxu0
  %336 = vmatprep.mubr.f32.mxu0 %v60
  %337 = vmatmul.mubr.f32.gmra.mxu0 %v155
  %v338 = vpop.f32.mrf.mxu0
  %v339 = vadd.f32 %v255, %v338
  %v340 = vpop.f32.mrf.mxu0
  %341 = vmatprep.mubr.f32.mxu0 %v61
  %342 = vmatmul.mubr.f32.gmra.mxu0 %v160
  %v343 = vpop.f32.mrf.mxu0
  %v344 = vadd.f32 %v255, %v343
  %v345 = vpop.f32.mrf.mxu0
  %346 = vmatprep.mubr.f32.mxu0 %v62
  %347 = vmatmul.mubr.f32.gmra.mxu0 %v165
  %v348 = vpop.f32.mrf.mxu0
  %v349 = vadd.f32 %v255, %v348
  %v350 = vpop.f32.mrf.mxu0
  %351 = vmatprep.mubr.f32.mxu0 %v63
  %352 = vmatmul.mubr.f32.gmra.mxu0 %v170
  %v353 = vpop.f32.mrf.mxu0
  %v354 = vadd.f32 %v255, %v353
  %v355 = vpop.f32.mrf.mxu0
  %356 = vmatprep.mubr.f32.mxu0 %v64
  %357 = vmatmul.mubr.f32.gmra.mxu0 %v175
  %v358 = vpop.f32.mrf.mxu0
  %v359 = vadd.f32 %v255, %v358
  %v360 = vpop.f32.mrf.mxu0
  %361 = vmatprep.mubr.f32.mxu0 %v65
  %362 = vmatmul.mubr.f32.gmra.mxu0 %v180
  %v363 = vpop.f32.mrf.mxu0
  %v364 = vadd.f32 %v255, %v363
  %v365 = vpop.f32.mrf.mxu0
  %366 = vmatprep.mubr.f32.mxu0 %v66
  %367 = vmatmul.mubr.f32.gmra.mxu0 %v185
  %v368 = vpop.f32.mrf.mxu0
  %v369 = vadd.f32 %v255, %v368
  %v370 = vpop.f32.mrf.mxu0
  %371 = vmatprep.mubr.f32.mxu0 %v67
  %372 = vmatmul.mubr.f32.gmra.mxu0 %v190
  %v373 = vpop.f32.mrf.mxu0
  %v374 = vadd.f32 %v255, %v373
  %v375 = vpop.f32.mrf.mxu0
  %376 = vmatprep.mubr.f32.mxu0 %v68
  %377 = vmatmul.mubr.f32.gmra.mxu0 %v195
  %v378 = vpop.f32.mrf.mxu0
  %v379 = vadd.f32 %v255, %v378
  %v380 = vpop.f32.mrf.mxu0
  %381 = vmatprep.mubr.f32.mxu0 %v69
  %382 = vmatmul.mubr.f32.gmra.mxu0 %v200
  %v383 = vpop.f32.mrf.mxu0
  %v384 = vadd.f32 %v255, %v383
  %v385 = vpop.f32.mrf.mxu0
  %386 = vmatprep.mubr.f32.mxu0 %v70
  %387 = vmatmul.mubr.f32.gmra.mxu0 %v205
  %v388 = vpop.f32.mrf.mxu0
  %v389 = vadd.f32 %v255, %v388
  %v390 = vpop.f32.mrf.mxu0
  %391 = vmatprep.mubr.f32.mxu0 %v71
  %392 = vmatmul.mubr.f32.gmra.mxu0 %v210
  %v393 = vpop.f32.mrf.mxu0
  %v394 = vadd.f32 %v255, %v393
  %v395 = vpop.f32.mrf.mxu0
  %396 = vmatprep.mubr.f32.mxu0 %v72
  %397 = vmatmul.mubr.f32.gmra.mxu0 %v215
  %v398 = vpop.f32.mrf.mxu0
  %v399 = vadd.f32 %v255, %v398
  %v400 = vpop.f32.mrf.mxu0
  %401 = vdwg.mxu0
  %v402 = vmax.f32 %v324, 0.0
  %v403 = vmax.f32 %v329, 0.0
  %v404 = vmax.f32 %v334, 0.0
  %v405 = vmax.f32 %v339, 0.0
  %v406 = vmax.f32 %v344, 0.0
  %v407 = vmax.f32 %v349, 0.0
  %v408 = vmax.f32 %v354, 0.0
  %v409 = vmax.f32 %v359, 0.0
  %v410 = vmax.f32 %v364, 0.0
  %v411 = vmax.f32 %v369, 0.0
  %v412 = vmax.f32 %v374, 0.0
  %v413 = vmax.f32 %v379, 0.0
  %v414 = vmax.f32 %v384, 0.0
  %v415 = vmax.f32 %v389, 0.0
  %v416 = vmax.f32 %v394, 0.0
  %v417 = vmax.f32 %v399, 0.0
  %418 = vmatprep.subr.mxu0 0.0
  %419 = vmatpush1.msra.mxu0 %v417
  %420 = vmatprep.subr.mxu0 0.0
  %421 = vmatpush1.msra.mxu0 %v416
  %422 = vmatprep.subr.mxu0 0.0
  %423 = vmatpush1.msra.mxu0 %v415
  %424 = vmatprep.subr.mxu0 0.0
  %425 = vmatpush1.msra.mxu0 %v414
  %426 = vmatprep.subr.mxu0 0.0
  %427 = vmatpush1.msra.mxu0 %v413
  %428 = vmatprep.subr.mxu0 0.0
  %429 = vmatpush1.msra.mxu0 %v412
  %430 = vmatprep.subr.mxu0 0.0
  %431 = vmatpush1.msra.mxu0 %v411
  %432 = vmatprep.subr.mxu0 0.0
  %433 = vmatpush1.msra.mxu0 %v410
  %434 = vmatprep.subr.mxu0 0.0
  %435 = vmatpush1.msra.mxu0 %v409
  %436 = vmatprep.subr.mxu0 0.0
  %437 = vmatpush1.msra.mxu0 %v408
  %438 = vmatprep.subr.mxu0 0.0
  %439 = vmatpush1.msra.mxu0 %v407
  %440 = vmatprep.subr.mxu0 0.0
  %441 = vmatpush1.msra.mxu0 %v406
  %442 = vmatprep.subr.mxu0 0.0
  %443 = vmatpush1.msra.mxu0 %v405
  %444 = vmatprep.subr.mxu0 0.0
  %445 = vmatpush1.msra.mxu0 %v404
  %446 = vmatprep.subr.mxu0 0.0
  %447 = vmatpush1.msra.mxu0 %v403
  %448 = vmatprep.subr.mxu0 0.0
  %449 = vmatpush1.msra.mxu0 %v402
  %450 = vmatprep.subr.mxu0 0.0
  %451 = vmatpush2.msra.mxu0 0.0
  %452 = vmatprep.subr.mxu0 0.0
  %453 = vmatpush2.msra.mxu0 0.0
  %454 = vmatprep.subr.mxu0 0.0
  %455 = vmatpush2.msra.mxu0 0.0
  %456 = vmatprep.subr.mxu0 0.0
  %457 = vmatpush2.msra.mxu0 0.0
  %458 = vmatprep.subr.mxu0 0.0
  %459 = vmatpush2.msra.mxu0 0.0
  %460 = vmatprep.subr.mxu0 0.0
  %461 = vmatpush2.msra.mxu0 0.0
  %462 = vmatprep.subr.mxu0 0.0
  %463 = vmatpush2.msra.mxu0 0.0
  %464 = vmatprep.subr.mxu0 0.0
  %465 = vmatpush2.msra.mxu0 0.0
  %466 = vmatprep.subr.mxu0 0.0
  %467 = vmatpush2.msra.mxu0 0.0
  %468 = vmatprep.subr.mxu0 0.0
  %469 = vmatpush2.msra.mxu0 0.0
  %470 = vmatprep.subr.mxu0 0.0
  %471 = vmatpush2.msra.mxu0 0.0
  %472 = vmatprep.subr.mxu0 0.0
  %473 = vmatpush2.msra.mxu0 0.0
  %474 = vmatprep.subr.mxu0 0.0
  %475 = vmatpush2.msra.mxu0 0.0
  %476 = vmatprep.subr.mxu0 0.0
  %477 = vmatpush2.msra.mxu0 0.0
  %478 = vmatprep.subr.mxu0 0.0
  %479 = vmatpush2.msra.mxu0 0.0
  %480 = vmatprep.subr.mxu0 0.0
  %481 = vmatpush2.msra.mxu0 0.0
  %482 = vmatprep.mubr.f32.mxu0 0.0
  %483 = vmatmul.mubr.f32.gmra.mxu0 %v41
  %v484 = vpop.f32.mrf.mxu0
  %v485 = vadd.f32 0.0, %v484
  %v486 = vpop.f32.mrf.mxu0
  %487 = vmatprep.mubr.f32.mxu0 0.0
  %488 = vmatmul.mubr.f32.gmra.mxu0 %v42
  %v489 = vpop.f32.mrf.mxu0
  %v490 = vadd.f32 0.0, %v489
  %v491 = vpop.f32.mrf.mxu0
  %492 = vmatprep.mubr.f32.mxu0 0.0
  %493 = vmatmul.mubr.f32.gmra.mxu0 %v43
  %v494 = vpop.f32.mrf.mxu0
  %v495 = vadd.f32 0.0, %v494
  %v496 = vpop.f32.mrf.mxu0
  %497 = vmatprep.mubr.f32.mxu0 0.0
  %498 = vmatmul.mubr.f32.gmra.mxu0 %v44
  %v499 = vpop.f32.mrf.mxu0
  %v500 = vadd.f32 0.0, %v499
  %v501 = vpop.f32.mrf.mxu0
  %502 = vmatprep.mubr.f32.mxu0 0.0
  %503 = vmatmul.mubr.f32.gmra.mxu0 %v45
  %v504 = vpop.f32.mrf.mxu0
  %v505 = vadd.f32 0.0, %v504
  %v506 = vpop.f32.mrf.mxu0
  %507 = vmatprep.mubr.f32.mxu0 0.0
  %508 = vmatmul.mubr.f32.gmra.mxu0 %v46
  %v509 = vpop.f32.mrf.mxu0
  %v510 = vadd.f32 0.0, %v509
  %v511 = vpop.f32.mrf.mxu0
  %512 = vmatprep.mubr.f32.mxu0 0.0
  %513 = vmatmul.mubr.f32.gmra.mxu0 %v47
  %v514 = vpop.f32.mrf.mxu0
  %v515 = vadd.f32 0.0, %v514
  %v516 = vpop.f32.mrf.mxu0
  %517 = vmatprep.mubr.f32.mxu0 0.0
  %518 = vmatmul.mubr.f32.gmra.mxu0 %v48
  %v519 = vpop.f32.mrf.mxu0
  %v520 = vadd.f32 0.0, %v519
  %v521 = vpop.f32.mrf.mxu0
  %522 = vmatprep.mubr.f32.mxu0 0.0
  %523 = vmatmul.mubr.f32.gmra.mxu0 %v49
  %v524 = vpop.f32.mrf.mxu0
  %v525 = vadd.f32 0.0, %v524
  %v526 = vpop.f32.mrf.mxu0
  %527 = vmatprep.mubr.f32.mxu0 0.0
  %528 = vmatmul.mubr.f32.gmra.mxu0 %v50
  %v529 = vpop.f32.mrf.mxu0
  %v530 = vadd.f32 0.0, %v529
  %v531 = vpop.f32.mrf.mxu0
  %532 = vmatprep.mubr.f32.mxu0 0.0
  %533 = vmatmul.mubr.f32.gmra.mxu0 %v51
  %v534 = vpop.f32.mrf.mxu0
  %v535 = vadd.f32 0.0, %v534
  %v536 = vpop.f32.mrf.mxu0
  %537 = vmatprep.mubr.f32.mxu0 0.0
  %538 = vmatmul.mubr.f32.gmra.mxu0 %v52
  %v539 = vpop.f32.mrf.mxu0
  %v540 = vadd.f32 0.0, %v539
  %v541 = vpop.f32.mrf.mxu0
  %542 = vmatprep.mubr.f32.mxu0 0.0
  %543 = vmatmul.mubr.f32.gmra.mxu0 %v53
  %v544 = vpop.f32.mrf.mxu0
  %v545 = vadd.f32 0.0, %v544
  %v546 = vpop.f32.mrf.mxu0
  %547 = vmatprep.mubr.f32.mxu0 0.0
  %548 = vmatmul.mubr.f32.gmra.mxu0 %v54
  %v549 = vpop.f32.mrf.mxu0
  %v550 = vadd.f32 0.0, %v549
  %v551 = vpop.f32.mrf.mxu0
  %552 = vmatprep.mubr.f32.mxu0 0.0
  %553 = vmatmul.mubr.f32.gmra.mxu0 %v55
  %v554 = vpop.f32.mrf.mxu0
  %v555 = vadd.f32 0.0, %v554
  %v556 = vpop.f32.mrf.mxu0
  %557 = vmatprep.mubr.f32.mxu0 0.0
  %558 = vmatmul.mubr.f32.gmra.mxu0 %v56
  %v559 = vpop.f32.mrf.mxu0
  %v560 = vadd.f32 0.0, %v559
  %v561 = vpop.f32.mrf.mxu0
  %562 = vdwg.mxu0
  %v563 = vld [vmem:[%s4] sm:$0xff]
  %v564 = vld [vmem:[%s4 + $0x8] sm:$0xff]
  %v565 = vld [vmem:[%s4 + $0x10] sm:$0xff]
  %v566 = vld [vmem:[%s4 + $0x18] sm:$0xff]
  %v567 = vld [vmem:[%s4 + $0x20] sm:$0xff]
  %v568 = vld [vmem:[%s4 + $0x28] sm:$0xff]
  %v569 = vld [vmem:[%s4 + $0x30] sm:$0xff]
  %v570 = vld [vmem:[%s4 + $0x38] sm:$0xff]
  %v571 = vld [vmem:[%s4 + $0x40] sm:$0xff]
  %v572 = vld [vmem:[%s4 + $0x48] sm:$0xff]
  %v573 = vld [vmem:[%s4 + $0x50] sm:$0xff]
  %v574 = vld [vmem:[%s4 + $0x58] sm:$0xff]
  %v575 = vld [vmem:[%s4 + $0x60] sm:$0xff]
  %v576 = vld [vmem:[%s4 + $0x68] sm:$0xff]
  %v577 = vld [vmem:[%s4 + $0x70] sm:$0xff]
  %v578 = vld [vmem:[%s4 + $0x78] sm:$0xff]
  %v579 = vld [vmem:[%s4 + $0x80] sm:$0xff]
  %v580 = vld [vmem:[%s4 + $0x88] sm:$0xff]
  %v581 = vld [vmem:[%s4 + $0x90] sm:$0xff]
  %v582 = vld [vmem:[%s4 + $0x98] sm:$0xff]
  %v583 = vld [vmem:[%s4 + $0xa0] sm:$0xff]
  %v584 = vld [vmem:[%s4 + $0xa8] sm:$0xff]
  %v585 = vld [vmem:[%s4 + $0xb0] sm:$0xff]
  %v586 = vld [vmem:[%s4 + $0xb8] sm:$0xff]
  %v587 = vld [vmem:[%s4 + $0xc0] sm:$0xff]
  %v588 = vld [vmem:[%s4 + $0xc8] sm:$0xff]
  %v589 = vld [vmem:[%s4 + $0xd0] sm:$0xff]
  %v590 = vld [vmem:[%s4 + $0xd8] sm:$0xff]
  %v591 = vld [vmem:[%s4 + $0xe0] sm:$0xff]
  %v592 = vld [vmem:[%s4 + $0xe8] sm:$0xff]
  %v593 = vld [vmem:[%s4 + $0xf0] sm:$0xff]
  %v594 = vld [vmem:[%s4 + $0xf8] sm:$0xff]
  %v595 = vld [vmem:[%s5] sm:$0x1]
  %v597 = vlaneseq
  %v598 = vshrl.u32 %v597, 7
  %v599 = vsub.s32 0, %v598
  %v600 = vrot.slane %v595, %v599
  %602 = vmatprep.subr.mxu0 0.0
  %603 = vmatpush1.msra.mxu0 %v578
  %604 = vmatprep.subr.mxu0 0.0
  %605 = vmatpush1.msra.mxu0 %v577
  %606 = vmatprep.subr.mxu0 0.0
  %607 = vmatpush1.msra.mxu0 %v576
  %608 = vmatprep.subr.mxu0 0.0
  %609 = vmatpush1.msra.mxu0 %v575
  %610 = vmatprep.subr.mxu0 0.0
  %611 = vmatpush1.msra.mxu0 %v574
  %612 = vmatprep.subr.mxu0 0.0
  %613 = vmatpush1.msra.mxu0 %v573
  %614 = vmatprep.subr.mxu0 0.0
  %615 = vmatpush1.msra.mxu0 %v572
  %616 = vmatprep.subr.mxu0 0.0
  %617 = vmatpush1.msra.mxu0 %v571
  %618 = vmatprep.subr.mxu0 0.0
  %619 = vmatpush1.msra.mxu0 %v570
  %620 = vmatprep.subr.mxu0 0.0
  %621 = vmatpush1.msra.mxu0 %v569
  %622 = vmatprep.subr.mxu0 0.0
  %623 = vmatpush1.msra.mxu0 %v568
  %624 = vmatprep.subr.mxu0 0.0
  %625 = vmatpush1.msra.mxu0 %v567
  %626 = vmatprep.subr.mxu0 0.0
  %627 = vmatpush1.msra.mxu0 %v566
  %628 = vmatprep.subr.mxu0 0.0
  %629 = vmatpush1.msra.mxu0 %v565
  %630 = vmatprep.subr.mxu0 0.0
  %631 = vmatpush1.msra.mxu0 %v564
  %632 = vmatprep.subr.mxu0 0.0
  %633 = vmatpush1.msra.mxu0 %v563
  %634 = vmatprep.subr.mxu0 0.0
  %635 = vmatpush2.msra.mxu0 %v594
  %636 = vmatprep.subr.mxu0 0.0
  %637 = vmatpush2.msra.mxu0 %v593
  %638 = vmatprep.subr.mxu0 0.0
  %639 = vmatpush2.msra.mxu0 %v592
  %640 = vmatprep.subr.mxu0 0.0
  %641 = vmatpush2.msra.mxu0 %v591
  %642 = vmatprep.subr.mxu0 0.0
  %643 = vmatpush2.msra.mxu0 %v590
  %644 = vmatprep.subr.mxu0 0.0
  %645 = vmatpush2.msra.mxu0 %v589
  %646 = vmatprep.subr.mxu0 0.0
  %647 = vmatpush2.msra.mxu0 %v588
  %648 = vmatprep.subr.mxu0 0.0
  %649 = vmatpush2.msra.mxu0 %v587
  %650 = vmatprep.subr.mxu0 0.0
  %651 = vmatpush2.msra.mxu0 %v586
  %652 = vmatprep.subr.mxu0 0.0
  %653 = vmatpush2.msra.mxu0 %v585
  %654 = vmatprep.subr.mxu0 0.0
  %655 = vmatpush2.msra.mxu0 %v584
  %656 = vmatprep.subr.mxu0 0.0
  %657 = vmatpush2.msra.mxu0 %v583
  %658 = vmatprep.subr.mxu0 0.0
  %659 = vmatpush2.msra.mxu0 %v582
  %660 = vmatprep.subr.mxu0 0.0
  %661 = vmatpush2.msra.mxu0 %v581
  %662 = vmatprep.subr.mxu0 0.0
  %663 = vmatpush2.msra.mxu0 %v580
  %664 = vmatprep.subr.mxu0 0.0
  %665 = vmatpush2.msra.mxu0 %v579
  %666 = vmatprep.mubr.f32.mxu0 %v402
  %667 = vmatmul.mubr.f32.gmra.mxu0 %v485
  %v668 = vpop.f32.mrf.mxu0
  %v669 = vadd.f32 %v600, %v668
  %v670 = vpop.f32.mrf.mxu0
  %671 = vmatprep.mubr.f32.mxu0 %v403
  %672 = vmatmul.mubr.f32.gmra.mxu0 %v490
  %v673 = vpop.f32.mrf.mxu0
  %v674 = vadd.f32 %v600, %v673
  %v675 = vpop.f32.mrf.mxu0
  %676 = vmatprep.mubr.f32.mxu0 %v404
  %677 = vmatmul.mubr.f32.gmra.mxu0 %v495
  %v678 = vpop.f32.mrf.mxu0
  %v679 = vadd.f32 %v600, %v678
  %v680 = vpop.f32.mrf.mxu0
  %681 = vmatprep.mubr.f32.mxu0 %v405
  %682 = vmatmul.mubr.f32.gmra.mxu0 %v500
  %v683 = vpop.f32.mrf.mxu0
  %v684 = vadd.f32 %v600, %v683
  %v685 = vpop.f32.mrf.mxu0
  %686 = vmatprep.mubr.f32.mxu0 %v406
  %687 = vmatmul.mubr.f32.gmra.mxu0 %v505
  %v688 = vpop.f32.mrf.mxu0
  %v689 = vadd.f32 %v600, %v688
  %v690 = vpop.f32.mrf.mxu0
  %691 = vmatprep.mubr.f32.mxu0 %v407
  %692 = vmatmul.mubr.f32.gmra.mxu0 %v510
  %v693 = vpop.f32.mrf.mxu0
  %v694 = vadd.f32 %v600, %v693
  %v695 = vpop.f32.mrf.mxu0
  %696 = vmatprep.mubr.f32.mxu0 %v408
  %697 = vmatmul.mubr.f32.gmra.mxu0 %v515
  %v698 = vpop.f32.mrf.mxu0
  %v699 = vadd.f32 %v600, %v698
  %v700 = vpop.f32.mrf.mxu0
  %701 = vmatprep.mubr.f32.mxu0 %v409
  %702 = vmatmul.mubr.f32.gmra.mxu0 %v520
  %v703 = vpop.f32.mrf.mxu0
  %v704 = vadd.f32 %v600, %v703
  %v705 = vpop.f32.mrf.mxu0
  %706 = vmatprep.mubr.f32.mxu0 %v410
  %707 = vmatmul.mubr.f32.gmra.mxu0 %v525
  %v708 = vpop.f32.mrf.mxu0
  %v709 = vadd.f32 %v600, %v708
  %v710 = vpop.f32.mrf.mxu0
  %711 = vmatprep.mubr.f32.mxu0 %v411
  %712 = vmatmul.mubr.f32.gmra.mxu0 %v530
  %v713 = vpop.f32.mrf.mxu0
  %v714 = vadd.f32 %v600, %v713
  %v715 = vpop.f32.mrf.mxu0
  %716 = vmatprep.mubr.f32.mxu0 %v412
  %717 = vmatmul.mubr.f32.gmra.mxu0 %v535
  %v718 = vpop.f32.mrf.mxu0
  %v719 = vadd.f32 %v600, %v718
  %v720 = vpop.f32.mrf.mxu0
  %721 = vmatprep.mubr.f32.mxu0 %v413
  %722 = vmatmul.mubr.f32.gmra.mxu0 %v540
  %v723 = vpop.f32.mrf.mxu0
  %v724 = vadd.f32 %v600, %v723
  %v725 = vpop.f32.mrf.mxu0
  %726 = vmatprep.mubr.f32.mxu0 %v414
  %727 = vmatmul.mubr.f32.gmra.mxu0 %v545
  %v728 = vpop.f32.mrf.mxu0
  %v729 = vadd.f32 %v600, %v728
  %v730 = vpop.f32.mrf.mxu0
  %731 = vmatprep.mubr.f32.mxu0 %v415
  %732 = vmatmul.mubr.f32.gmra.mxu0 %v550
  %v733 = vpop.f32.mrf.mxu0
  %v734 = vadd.f32 %v600, %v733
  %v735 = vpop.f32.mrf.mxu0
  %736 = vmatprep.mubr.f32.mxu0 %v416
  %737 = vmatmul.mubr.f32.gmra.mxu0 %v555
  %v738 = vpop.f32.mrf.mxu0
  %v739 = vadd.f32 %v600, %v738
  %v740 = vpop.f32.mrf.mxu0
  %741 = vmatprep.mubr.f32.mxu0 %v417
  %742 = vmatmul.mubr.f32.gmra.mxu0 %v560
  %v743 = vpop.f32.mrf.mxu0
  %v744 = vadd.f32 %v600, %v743
  %v745 = vpop.f32.mrf.mxu0
  %746 = vdwg.mxu0
  %v747 = vld [vmem:[%s6] sm:$0xff]
  %v748 = vld [vmem:[%s6 + $0x8] sm:$0xff]
  %v749 = vld [vmem:[%s6 + $0x10] sm:$0xff]
  %750 = vmatprep.subr.mxu0 0.0
  %751 = vmatpush1.msra.mxu0 %v744
  %752 = vmatprep.subr.mxu0 0.0
  %753 = vmatpush1.msra.mxu0 %v739
  %754 = vmatprep.subr.mxu0 0.0
  %755 = vmatpush1.msra.mxu0 %v734
  %756 = vmatprep.subr.mxu0 0.0
  %757 = vmatpush1.msra.mxu0 %v729
  %758 = vmatprep.subr.mxu0 0.0
  %759 = vmatpush1.msra.mxu0 %v724
  %760 = vmatprep.subr.mxu0 0.0
  %761 = vmatpush1.msra.mxu0 %v719
  %762 = vmatprep.subr.mxu0 0.0
  %763 = vmatpush1.msra.mxu0 %v714
  %764 = vmatprep.subr.mxu0 0.0
  %765 = vmatpush1.msra.mxu0 %v709
  %766 = vmatprep.subr.mxu0 0.0
  %767 = vmatpush1.msra.mxu0 %v704
  %768 = vmatprep.subr.mxu0 0.0
  %769 = vmatpush1.msra.mxu0 %v699
  %770 = vmatprep.subr.mxu0 0.0
  %771 = vmatpush1.msra.mxu0 %v694
  %772 = vmatprep.subr.mxu0 0.0
  %773 = vmatpush1.msra.mxu0 %v689
  %774 = vmatprep.subr.mxu0 0.0
  %775 = vmatpush1.msra.mxu0 %v684
  %776 = vmatprep.subr.mxu0 0.0
  %777 = vmatpush1.msra.mxu0 %v679
  %778 = vmatprep.subr.mxu0 0.0
  %779 = vmatpush1.msra.mxu0 %v674
  %780 = vmatprep.subr.mxu0 0.0
  %781 = vmatpush1.msra.mxu0 %v669
  %782 = vmatprep.subr.mxu0 0.0
  %783 = vmatpush2.msra.mxu0 0.0
  %784 = vmatprep.subr.mxu0 0.0
  %785 = vmatpush2.msra.mxu0 0.0
  %786 = vmatprep.subr.mxu0 0.0
  %787 = vmatpush2.msra.mxu0 0.0
  %788 = vmatprep.subr.mxu0 0.0
  %789 = vmatpush2.msra.mxu0 0.0
  %790 = vmatprep.subr.mxu0 0.0
  %791 = vmatpush2.msra.mxu0 0.0
  %792 = vmatprep.subr.mxu0 0.0
  %793 = vmatpush2.msra.mxu0 0.0
  %794 = vmatprep.subr.mxu0 0.0
  %795 = vmatpush2.msra.mxu0 0.0
  %796 = vmatprep.subr.mxu0 0.0
  %797 = vmatpush2.msra.mxu0 0.0
  %798 = vmatprep.subr.mxu0 0.0
  %799 = vmatpush2.msra.mxu0 0.0
  %800 = vmatprep.subr.mxu0 0.0
  %801 = vmatpush2.msra.mxu0 0.0
  %802 = vmatprep.subr.mxu0 0.0
  %803 = vmatpush2.msra.mxu0 0.0
  %804 = vmatprep.subr.mxu0 0.0
  %805 = vmatpush2.msra.mxu0 0.0
  %806 = vmatprep.subr.mxu0 0.0
  %807 = vmatpush2.msra.mxu0 0.0
  %808 = vmatprep.subr.mxu0 0.0
  %809 = vmatpush2.msra.mxu0 0.0
  %810 = vmatprep.subr.mxu0 0.0
  %811 = vmatpush2.msra.mxu0 0.0
  %812 = vmatprep.subr.mxu0 0.0
  %813 = vmatpush2.msra.mxu0 0.0
  %814 = vmatprep.mubr.f32.mxu0 0.0
  %815 = vmatmul.mubr.f32.gmra.mxu0 %v747
  %v816 = vpop.f32.mrf.mxu0
  %v817 = vadd.f32 0.0, %v816
  %v818 = vpop.f32.mrf.mxu0
  %819 = vmatprep.mubr.f32.mxu0 0.0
  %820 = vmatmul.mubr.f32.gmra.mxu0 %v748
  %v821 = vpop.f32.mrf.mxu0
  %v822 = vadd.f32 0.0, %v821
  %v823 = vpop.f32.mrf.mxu0
  %824 = vmatprep.mubr.f32.mxu0 0.0
  %825 = vmatmul.mubr.f32.gmra.mxu0 %v749
  %v826 = vpop.f32.mrf.mxu0
  %v827 = vadd.f32 0.0, %v826
  %v828 = vpop.f32.mrf.mxu0
  %829 = vdwg.mxu0
  %v830 = vld [vmem:[%s7] sm:$0xff]
  %v831 = vld [vmem:[%s7 + $0x8] sm:$0xff]
  %v832 = vld [vmem:[%s7 + $0x10] sm:$0xff]
  %833 = vmatprep.subr.mxu0 0.0
  %834 = vmatpush1.msra.mxu0 %v744
  %835 = vmatprep.subr.mxu0 0.0
  %836 = vmatpush1.msra.mxu0 %v739
  %837 = vmatprep.subr.mxu0 0.0
  %838 = vmatpush1.msra.mxu0 %v734
  %839 = vmatprep.subr.mxu0 0.0
  %840 = vmatpush1.msra.mxu0 %v729
  %841 = vmatprep.subr.mxu0 0.0
  %842 = vmatpush1.msra.mxu0 %v724
  %843 = vmatprep.subr.mxu0 0.0
  %844 = vmatpush1.msra.mxu0 %v719
  %845 = vmatprep.subr.mxu0 0.0
  %846 = vmatpush1.msra.mxu0 %v714
  %847 = vmatprep.subr.mxu0 0.0
  %848 = vmatpush1.msra.mxu0 %v709
  %849 = vmatprep.subr.mxu0 0.0
  %850 = vmatpush1.msra.mxu0 %v704
  %851 = vmatprep.subr.mxu0 0.0
  %852 = vmatpush1.msra.mxu0 %v699
  %853 = vmatprep.subr.mxu0 0.0
  %854 = vmatpush1.msra.mxu0 %v694
  %855 = vmatprep.subr.mxu0 0.0
  %856 = vmatpush1.msra.mxu0 %v689
  %857 = vmatprep.subr.mxu0 0.0
  %858 = vmatpush1.msra.mxu0 %v684
  %859 = vmatprep.subr.mxu0 0.0
  %860 = vmatpush1.msra.mxu0 %v679
  %861 = vmatprep.subr.mxu0 0.0
  %862 = vmatpush1.msra.mxu0 %v674
  %863 = vmatprep.subr.mxu0 0.0
  %864 = vmatpush1.msra.mxu0 %v669
  %865 = vmatprep.subr.mxu0 0.0
  %866 = vmatpush2.msra.mxu0 0.0
  %867 = vmatprep.subr.mxu0 0.0
  %868 = vmatpush2.msra.mxu0 0.0
  %869 = vmatprep.subr.mxu0 0.0
  %870 = vmatpush2.msra.mxu0 0.0
  %871 = vmatprep.subr.mxu0 0.0
  %872 = vmatpush2.msra.mxu0 0.0
  %873 = vmatprep.subr.mxu0 0.0
  %874 = vmatpush2.msra.mxu0 0.0
  %875 = vmatprep.subr.mxu0 0.0
  %876 = vmatpush2.msra.mxu0 0.0
  %877 = vmatprep.subr.mxu0 0.0
  %878 = vmatpush2.msra.mxu0 0.0
  %879 = vmatprep.subr.mxu0 0.0
  %880 = vmatpush2.msra.mxu0 0.0
  %881 = vmatprep.subr.mxu0 0.0
  %882 = vmatpush2.msra.mxu0 0.0
  %883 = vmatprep.subr.mxu0 0.0
  %884 = vmatpush2.msra.mxu0 0.0
  %885 = vmatprep.subr.mxu0 0.0
  %886 = vmatpush2.msra.mxu0 0.0
  %887 = vmatprep.subr.mxu0 0.0
  %888 = vmatpush2.msra.mxu0 0.0
  %889 = vmatprep.subr.mxu0 0.0
  %890 = vmatpush2.msra.mxu0 0.0
  %891 = vmatprep.subr.mxu0 0.0
  %892 = vmatpush2.msra.mxu0 0.0
  %893 = vmatprep.subr.mxu0 0.0
  %894 = vmatpush2.msra.mxu0 0.0
  %895 = vmatprep.subr.mxu0 0.0
  %896 = vmatpush2.msra.mxu0 0.0
  %897 = vmatprep.mubr.f32.mxu0 0.0
  %898 = vmatmul.mubr.f32.gmra.mxu0 %v830
  %v899 = vpop.f32.mrf.mxu0
  %v900 = vadd.f32 0.0, %v899
  %v901 = vpop.f32.mrf.mxu0
  %902 = vmatprep.mubr.f32.mxu0 0.0
  %903 = vmatmul.mubr.f32.gmra.mxu0 %v831
  %v904 = vpop.f32.mrf.mxu0
  %v905 = vadd.f32 0.0, %v904
  %v906 = vpop.f32.mrf.mxu0
  %907 = vmatprep.mubr.f32.mxu0 0.0
  %908 = vmatmul.mubr.f32.gmra.mxu0 %v832
  %v909 = vpop.f32.mrf.mxu0
  %v910 = vadd.f32 0.0, %v909
  %v911 = vpop.f32.mrf.mxu0
  %912 = vdwg.mxu0
  %v913 = vld [vmem:[%s8] sm:$0xff]
  %v914 = vld [vmem:[%s8 + $0x8] sm:$0xff]
  %v915 = vld [vmem:[%s8 + $0x10] sm:$0xff]
  %v916 = vld [vmem:[%s8 + $0x18] sm:$0xff]
  %v917 = vld [vmem:[%s8 + $0x20] sm:$0xff]
  %v918 = vld [vmem:[%s8 + $0x28] sm:$0xff]
  %v919 = vld [vmem:[%s8 + $0x30] sm:$0xff]
  %v920 = vld [vmem:[%s8 + $0x38] sm:$0xff]
  %v921 = vld [vmem:[%s8 + $0x40] sm:$0xff]
  %v922 = vld [vmem:[%s8 + $0x48] sm:$0xff]
  %v923 = vld [vmem:[%s8 + $0x50] sm:$0xff]
  %v924 = vld [vmem:[%s8 + $0x58] sm:$0xff]
  %v925 = vld [vmem:[%s8 + $0x60] sm:$0xff]
  %v926 = vld [vmem:[%s8 + $0x68] sm:$0xff]
  %v927 = vld [vmem:[%s8 + $0x70] sm:$0xff]
  %v928 = vld [vmem:[%s8 + $0x78] sm:$0xff]
  %v929 = vld [vmem:[%s8 + $0x80] sm:$0xff]
  %v930 = vld [vmem:[%s8 + $0x88] sm:$0xff]
  %v931 = vld [vmem:[%s8 + $0x90] sm:$0xff]
  %v932 = vld [vmem:[%s8 + $0x98] sm:$0xff]
  %v933 = vld [vmem:[%s8 + $0xa0] sm:$0xff]
  %v934 = vld [vmem:[%s8 + $0xa8] sm:$0xff]
  %v935 = vld [vmem:[%s8 + $0xb0] sm:$0xff]
  %v936 = vld [vmem:[%s8 + $0xb8] sm:$0xff]
  %v937 = vld [vmem:[%s8 + $0xc0] sm:$0xff]
  %v938 = vld [vmem:[%s8 + $0xc8] sm:$0xff]
  %v939 = vld [vmem:[%s8 + $0xd0] sm:$0xff]
  %v940 = vld [vmem:[%s8 + $0xd8] sm:$0xff]
  %v941 = vld [vmem:[%s8 + $0xe0] sm:$0xff]
  %v942 = vld [vmem:[%s8 + $0xe8] sm:$0xff]
  %v943 = vld [vmem:[%s8 + $0xf0] sm:$0xff]
  %v944 = vld [vmem:[%s8 + $0xf8] sm:$0xff]
  %v945 = vld [vmem:[%s9] sm:$0x1]
  %v947 = vlaneseq
  %v948 = vshrl.u32 %v947, 7
  %v949 = vsub.s32 0, %v948
  %v950 = vrot.slane %v945, %v949
  %952 = vmatprep.subr.mxu0 0.0
  %953 = vmatpush1.msra.mxu0 %v928
  %954 = vmatprep.subr.mxu0 0.0
  %955 = vmatpush1.msra.mxu0 %v927
  %956 = vmatprep.subr.mxu0 0.0
  %957 = vmatpush1.msra.mxu0 %v926
  %958 = vmatprep.subr.mxu0 0.0
  %959 = vmatpush1.msra.mxu0 %v925
  %960 = vmatprep.subr.mxu0 0.0
  %961 = vmatpush1.msra.mxu0 %v924
  %962 = vmatprep.subr.mxu0 0.0
  %963 = vmatpush1.msra.mxu0 %v923
  %964 = vmatprep.subr.mxu0 0.0
  %965 = vmatpush1.msra.mxu0 %v922
  %966 = vmatprep.subr.mxu0 0.0
  %967 = vmatpush1.msra.mxu0 %v921
  %968 = vmatprep.subr.mxu0 0.0
  %969 = vmatpush1.msra.mxu0 %v920
  %970 = vmatprep.subr.mxu0 0.0
  %971 = vmatpush1.msra.mxu0 %v919
  %972 = vmatprep.subr.mxu0 0.0
  %973 = vmatpush1.msra.mxu0 %v918
  %974 = vmatprep.subr.mxu0 0.0
  %975 = vmatpush1.msra.mxu0 %v917
  %976 = vmatprep.subr.mxu0 0.0
  %977 = vmatpush1.msra.mxu0 %v916
  %978 = vmatprep.subr.mxu0 0.0
  %979 = vmatpush1.msra.mxu0 %v915
  %980 = vmatprep.subr.mxu0 0.0
  %981 = vmatpush1.msra.mxu0 %v914
  %982 = vmatprep.subr.mxu0 0.0
  %983 = vmatpush1.msra.mxu0 %v913
  %984 = vmatprep.subr.mxu0 0.0
  %985 = vmatpush2.msra.mxu0 %v944
  %986 = vmatprep.subr.mxu0 0.0
  %987 = vmatpush2.msra.mxu0 %v943
  %988 = vmatprep.subr.mxu0 0.0
  %989 = vmatpush2.msra.mxu0 %v942
  %990 = vmatprep.subr.mxu0 0.0
  %991 = vmatpush2.msra.mxu0 %v941
  %992 = vmatprep.subr.mxu0 0.0
  %993 = vmatpush2.msra.mxu0 %v940
  %994 = vmatprep.subr.mxu0 0.0
  %995 = vmatpush2.msra.mxu0 %v939
  %996 = vmatprep.subr.mxu0 0.0
  %997 = vmatpush2.msra.mxu0 %v938
  %998 = vmatprep.subr.mxu0 0.0
  %999 = vmatpush2.msra.mxu0 %v937
  %1000 = vmatprep.subr.mxu0 0.0
  %1001 = vmatpush2.msra.mxu0 %v936
  %1002 = vmatprep.subr.mxu0 0.0
  %1003 = vmatpush2.msra.mxu0 %v935
  %1004 = vmatprep.subr.mxu0 0.0
  %1005 = vmatpush2.msra.mxu0 %v934
  %1006 = vmatprep.subr.mxu0 0.0
  %1007 = vmatpush2.msra.mxu0 %v933
  %1008 = vmatprep.subr.mxu0 0.0
  %1009 = vmatpush2.msra.mxu0 %v932
  %1010 = vmatprep.subr.mxu0 0.0
  %1011 = vmatpush2.msra.mxu0 %v931
  %1012 = vmatprep.subr.mxu0 0.0
  %1013 = vmatpush2.msra.mxu0 %v930
  %1014 = vmatprep.subr.mxu0 0.0
  %1015 = vmatpush2.msra.mxu0 %v929
  %1016 = vmatprep.mubr.f32.mxu0 %v900
  %1017 = vmatmul.mubr.f32.gmra.mxu0 %v817
  %v1018 = vpop.f32.mrf.mxu0
  %v1019 = vadd.f32 %v950, %v1018
  %v1020 = vpop.f32.mrf.mxu0
  %1021 = vmatprep.mubr.f32.mxu0 %v905
  %1022 = vmatmul.mubr.f32.gmra.mxu0 %v822
  %v1023 = vpop.f32.mrf.mxu0
  %v1024 = vadd.f32 %v950, %v1023
  %v1025 = vpop.f32.mrf.mxu0
  %1026 = vmatprep.mubr.f32.mxu0 %v910
  %1027 = vmatmul.mubr.f32.gmra.mxu0 %v827
  %v1028 = vpop.f32.mrf.mxu0
  %v1029 = vadd.f32 %v950, %v1028
  %v1030 = vpop.f32.mrf.mxu0
  %1031 = vdwg.mxu0
  %v1032 = vmax.f32 %v1019, 0.0
  %v1033 = vmax.f32 %v1024, 0.0
  %v1034 = vmax.f32 %v1029, 0.0
  %v1035 = vld [vmem:[%s10] sm:$0xff]
  %v1036 = vld [vmem:[%s10 + $0x8] sm:$0xff]
  %v1037 = vld [vmem:[%s10 + $0x10] sm:$0xff]
  %v1038 = vld [vmem:[%s10 + $0x18] sm:$0xff]
  %v1039 = vld [vmem:[%s10 + $0x20] sm:$0xff]
  %v1040 = vld [vmem:[%s10 + $0x28] sm:$0xff]
  %v1041 = vld [vmem:[%s10 + $0x30] sm:$0xff]
  %v1042 = vld [vmem:[%s10 + $0x38] sm:$0xff]
  %v1043 = vld [vmem:[%s10 + $0x40] sm:$0xff]
  %v1044 = vld [vmem:[%s10 + $0x48] sm:$0xff]
  %v1045 = vld [vmem:[%s10 + $0x50] sm:$0xff]
  %v1046 = vld [vmem:[%s10 + $0x58] sm:$0xff]
  %v1047 = vld [vmem:[%s10 + $0x60] sm:$0xff]
  %v1048 = vld [vmem:[%s10 + $0x68] sm:$0xff]
  %v1049 = vld [vmem:[%s10 + $0x70] sm:$0xff]
  %v1050 = vld [vmem:[%s10 + $0x78] sm:$0xff]
  %v1051 = vld [vmem:[%s11] sm:$0x1]
  %v1053 = vlaneseq
  %v1054 = vshrl.u32 %v1053, 7
  %v1055 = vsub.s32 0, %v1054
  %v1056 = vrot.slane %v1051, %v1055
  %1058 = vmatprep.subr.mxu0 0.0
  %1059 = vmatpush1.msra.mxu0 %v1050
  %1060 = vmatprep.subr.mxu0 0.0
  %1061 = vmatpush1.msra.mxu0 %v1049
  %1062 = vmatprep.subr.mxu0 0.0
  %1063 = vmatpush1.msra.mxu0 %v1048
  %1064 = vmatprep.subr.mxu0 0.0
  %1065 = vmatpush1.msra.mxu0 %v1047
  %1066 = vmatprep.subr.mxu0 0.0
  %1067 = vmatpush1.msra.mxu0 %v1046
  %1068 = vmatprep.subr.mxu0 0.0
  %1069 = vmatpush1.msra.mxu0 %v1045
  %1070 = vmatprep.subr.mxu0 0.0
  %1071 = vmatpush1.msra.mxu0 %v1044
  %1072 = vmatprep.subr.mxu0 0.0
  %1073 = vmatpush1.msra.mxu0 %v1043
  %1074 = vmatprep.subr.mxu0 0.0
  %1075 = vmatpush1.msra.mxu0 %v1042
  %1076 = vmatprep.subr.mxu0 0.0
  %1077 = vmatpush1.msra.mxu0 %v1041
  %1078 = vmatprep.subr.mxu0 0.0
  %1079 = vmatpush1.msra.mxu0 %v1040
  %1080 = vmatprep.subr.mxu0 0.0
  %1081 = vmatpush1.msra.mxu0 %v1039
  %1082 = vmatprep.subr.mxu0 0.0
  %1083 = vmatpush1.msra.mxu0 %v1038
  %1084 = vmatprep.subr.mxu0 0.0
  %1085 = vmatpush1.msra.mxu0 %v1037
  %1086 = vmatprep.subr.mxu0 0.0
  %1087 = vmatpush1.msra.mxu0 %v1036
  %1088 = vmatprep.subr.mxu0 0.0
  %1089 = vmatpush1.msra.mxu0 %v1035
  %1090 = vmatprep.subr.mxu0 0.0
  %1091 = vmatpush2.msra.mxu0 0.0
  %1092 = vmatprep.subr.mxu0 0.0
  %1093 = vmatpush2.msra.mxu0 0.0
  %1094 = vmatprep.subr.mxu0 0.0
  %1095 = vmatpush2.msra.mxu0 0.0
  %1096 = vmatprep.subr.mxu0 0.0
  %1097 = vmatpush2.msra.mxu0 0.0
  %1098 = vmatprep.subr.mxu0 0.0
  %1099 = vmatpush2.msra.mxu0 0.0
  %1100 = vmatprep.subr.mxu0 0.0
  %1101 = vmatpush2.msra.mxu0 0.0
  %1102 = vmatprep.subr.mxu0 0.0
  %1103 = vmatpush2.msra.mxu0 0.0
  %1104 = vmatprep.subr.mxu0 0.0
  %1105 = vmatpush2.msra.mxu0 0.0
  %1106 = vmatprep.subr.mxu0 0.0
  %1107 = vmatpush2.msra.mxu0 0.0
  %1108 = vmatprep.subr.mxu0 0.0
  %1109 = vmatpush2.msra.mxu0 0.0
  %1110 = vmatprep.subr.mxu0 0.0
  %1111 = vmatpush2.msra.mxu0 0.0
  %1112 = vmatprep.subr.mxu0 0.0
  %1113 = vmatpush2.msra.mxu0 0.0
  %1114 = vmatprep.subr.mxu0 0.0
  %1115 = vmatpush2.msra.mxu0 0.0
  %1116 = vmatprep.subr.mxu0 0.0
  %1117 = vmatpush2.msra.mxu0 0.0
  %1118 = vmatprep.subr.mxu0 0.0
  %1119 = vmatpush2.msra.mxu0 0.0
  %1120 = vmatprep.subr.mxu0 0.0
  %1121 = vmatpush2.msra.mxu0 0.0
  %1122 = vmatprep.mubr.f32.mxu0 0.0
  %1123 = vmatmul.mubr.f32.gmra.mxu0 %v1032
  %v1124 = vpop.f32.mrf.mxu0
  %v1125 = vadd.f32 %v1056, %v1124
  %v1126 = vpop.f32.mrf.mxu0
  %1127 = vmatprep.mubr.f32.mxu0 0.0
  %1128 = vmatmul.mubr.f32.gmra.mxu0 %v1033
  %v1129 = vpop.f32.mrf.mxu0
  %v1130 = vadd.f32 %v1056, %v1129
  %v1131 = vpop.f32.mrf.mxu0
  %1132 = vmatprep.mubr.f32.mxu0 0.0
  %1133 = vmatmul.mubr.f32.gmra.mxu0 %v1034
  %v1134 = vpop.f32.mrf.mxu0
  %v1135 = vadd.f32 %v1056, %v1134
  %v1136 = vpop.f32.mrf.mxu0
  %1137 = vdwg.mxu0
  %1138 = vst [vmem:[%s12] sm:$0xff] %v1125
  %1139 = vst [vmem:[%s12 + $0x8] sm:$0xff] %v1130
  %1140 = vst [vmem:[%s12 + $0x10] sm:$0xff] %v1135
  // Predicated region
  $region50: #{sd_regression_forward.1} parent=0 // pred_check
    _
  $region51: #{sd_regression_forward.1} parent=0 // pred_check_branch
    %1142 = sbr.rel (0) target = $region53
  $region52: #{sd_regression_forward.1} parent=0 // pred_region
    _
  $region53: #{sd_regression_forward.1} parent=0 // pred_fallthru
    _
  // Predicated region
  $region54: #{sd_regression_forward.1} parent=0 // pred_check
    _
  $region55: #{sd_regression_forward.1} parent=0 // pred_check_branch
    %1144 = sbr.rel (0) target = $region57
  $region56: #{sd_regression_forward.1} parent=0 // pred_region
    _
  $region57: #{sd_regression_forward.1} parent=0 // pred_fallthru
    _

</llo_original>
